<compile_context>
chip_gen: v7x
topology: tpu7x:2x2x1
jax: 0.10.0
libtpu: 0.0.40
codegen_flags: <defaults>
</compile_context>

<pallas_src>
import math

import jax
import jax.numpy as jnp
from jax.experimental import pallas as pl
from jax.experimental.pallas import tpu as pltpu


def _round_up(n: int, m: int) -> int:
    return ((n + m - 1) // m) * m


def _value_net_kernel(x1_ref, x2_ref, w1a_ref, w1b_ref, b1_ref,
                      w2_ref, b2_ref, w3t_ref, b3_ref, o_ref):
    """One batch tile: fused 3-layer MLP, bf16 MXU matmuls, f32 accum/activations."""
    x1 = x1_ref[...].astype(jnp.bfloat16)
    x2 = x2_ref[...].astype(jnp.bfloat16)

    # Layer 1: concat fused as two partial matmuls (no HBM concat).
    h1 = jnp.dot(x1, w1a_ref[...], preferred_element_type=jnp.float32)
    h1 = h1 + jnp.dot(x2, w1b_ref[...], preferred_element_type=jnp.float32)
    h1 = jnp.maximum(h1 + b1_ref[...], 0.0)                      # (TILE_B, 128) f32

    # Layer 2.
    h2 = jnp.dot(h1.astype(jnp.bfloat16), w2_ref[...],
                 preferred_element_type=jnp.float32)
    h2 = jnp.maximum(h2 + b2_ref[...], 0.0)                      # (TILE_B, 128) f32

    # Layer 3, lane-dense output: (1,128) . (TILE_B,128)^T -> (1, TILE_B),
    # i.e. the standard A @ B^T (q.k^T) contraction over the lane axis.
    out = jax.lax.dot_general(
        w3t_ref[...], h2.astype(jnp.bfloat16),
        dimension_numbers=(((1,), (1,)), ((), ())),
        preferred_element_type=jnp.float32)                      # (1, TILE_B) f32

    o_ref[...] = out + b3_ref[0]                                 # scalar bias from SMEM


def value_network_forward(x1, x2, params, *, tile_b: int = 1024):
    """Forward pass of ValueNetwork. x1: (B, D1), x2: (B, D2) -> (B, 1)."""
    w1, b1, w2, b2, w3, b3 = params
    B, d1 = x1.shape
    d2 = x2.shape[1]
    assert w1.shape[0] == d1 + d2

    # Weights: split layer-1 weight so the concat never hits HBM; store bf16.
    w1a = w1[:d1].astype(jnp.bfloat16)          # (D1, 128)
    w1b = w1[d1:].astype(jnp.bfloat16)          # (D2, 128)
    w2b = w2.astype(jnp.bfloat16)               # (128, 128)
    w3t = w3.reshape(1, -1).astype(jnp.bfloat16)  # (1, 128)
    b3s = b3.reshape(1).astype(jnp.float32)     # (1,) scalar via SMEM

    # Tile selection: big lane-aligned tiles; single tile for small batches.
    if B <= tile_b:
        tile = _round_up(max(B, 1), 8)
    else:
        tile = _round_up(tile_b, 128)
    b_pad = _round_up(B, tile)
    if b_pad != B:
        pad = b_pad - B
        x1 = jnp.pad(x1, ((0, pad), (0, 0)))
        x2 = jnp.pad(x2, ((0, pad), (0, 0)))

    grid = (b_pad // tile,)
    const2 = lambda i: (0, 0)                    # weights: resident across the grid

    in_specs = [
        pl.BlockSpec((tile, d1), lambda i: (i, 0)),      # x1 tile (pipelined)
        pl.BlockSpec((tile, d2), lambda i: (i, 0)),      # x2 tile (pipelined)
        pl.BlockSpec((d1, 128), const2),                 # w1a
        pl.BlockSpec((d2, 128), const2),                 # w1b
        pl.BlockSpec((1, 128), const2),                  # b1
        pl.BlockSpec((128, 128), const2),                # w2
        pl.BlockSpec((1, 128), const2),                  # b2
        pl.BlockSpec((1, 128), const2),                  # w3^T
        pl.BlockSpec(memory_space=pltpu.MemorySpace.SMEM),  # b3 scalar
    ]
    out_spec = pl.BlockSpec((1, tile), lambda i: (0, i))  # lane-dense (1, TILE_B)

    out = pl.pallas_call(
        _value_net_kernel,
        out_shape=jax.ShapeDtypeStruct((1, b_pad), jnp.float32),
        grid=grid,
        in_specs=in_specs,
        out_specs=out_spec,
        compiler_params=pltpu.CompilerParams(
            dimension_semantics=("parallel",)),   # batch tiles -> both TCs on v7x
    )(x1, x2, w1a, w1b, b1, w2b, b2, w3t, b3s)

    return out[0, :B].reshape(B, 1)


def init_value_network_params(key, input_size, param_init_value=3e-3):
    """Matches PyTorch init semantics:
    - layers 0, 2: default nn.Linear init, U(-1/sqrt(fan_in), 1/sqrt(fan_in))
    - layer 4: U(-param_init_value, param_init_value) for weight and bias.
    Weights stored as (in_features, out_features) for x @ W; kept in f32.
    """
    k1, k2, k3, k4, k5, k6 = jax.random.split(key, 6)

    bound1 = 1.0 / math.sqrt(input_size)
    w1 = jax.random.uniform(k1, (input_size, 128), jnp.float32, -bound1, bound1)
    b1 = jax.random.uniform(k2, (1, 128), jnp.float32, -bound1, bound1)

    bound2 = 1.0 / math.sqrt(128)
    w2 = jax.random.uniform(k3, (128, 128), jnp.float32, -bound2, bound2)
    b2 = jax.random.uniform(k4, (1, 128), jnp.float32, -bound2, bound2)

    w3 = jax.random.uniform(k5, (128, 1), jnp.float32,
                            -param_init_value, param_init_value)
    b3 = jax.random.uniform(k6, (1,), jnp.float32,
                            -param_init_value, param_init_value)

    return (w1, b1, w2, b2, w3, b3)


if __name__ == "__main__":
    # Small shapes: batch=8, x1 has 16 features, x2 has 16 features -> input_size=32.
    B, D1, D2 = 8, 16, 16
    input_size = D1 + D2

    key = jax.random.PRNGKey(0)
    kx1, kx2, kp = jax.random.split(key, 3)
    x1 = jax.random.normal(kx1, (B, D1), jnp.float32)
    x2 = jax.random.normal(kx2, (B, D2), jnp.float32)

    params = init_value_network_params(kp, input_size, param_init_value=3e-3)

    out = value_network_forward(x1, x2, params)
    jax.block_until_ready(out)
    assert out.shape == (B, 1)

    w1, b1, w2, b2, w3, b3 = params

    # Reference 1: same bf16-matmul / f32-accumulate math as the kernel (tight check).
    w1a = w1[:D1].astype(jnp.bfloat16)
    w1b = w1[D1:].astype(jnp.bfloat16)
    h1 = (jnp.dot(x1.astype(jnp.bfloat16), w1a, preferred_element_type=jnp.float32)
          + jnp.dot(x2.astype(jnp.bfloat16), w1b, preferred_element_type=jnp.float32))
    h1 = jnp.maximum(h1 + b1, 0.0)
    h2 = jnp.dot(h1.astype(jnp.bfloat16), w2.astype(jnp.bfloat16),
                 preferred_element_type=jnp.float32)
    h2 = jnp.maximum(h2 + b2, 0.0)
    ref_bf16 = jnp.dot(h2.astype(jnp.bfloat16), w3.astype(jnp.bfloat16),
                       preferred_element_type=jnp.float32) + b3
    assert jnp.allclose(out, ref_bf16, atol=1e-4, rtol=1e-2), "bf16-path mismatch"

    # Reference 2: pure f32 PyTorch semantics (loose check for bf16 rounding).
    x = jnp.concatenate([x1, x2], axis=-1)
    ref = jnp.maximum(x @ w1 + b1, 0.0)
    ref = jnp.maximum(ref @ w2 + b2, 0.0)
    ref = ref @ w3 + b3
    assert jnp.allclose(out, ref, atol=2e-3, rtol=2e-2), "f32 semantics mismatch"

    print("KERNEL_OK")
</pallas_src>

<mosaic_0001>
module attributes {stable_mosaic.version = 11 : i64} {
  func.func @_value_net_kernel(%arg0: i32, %arg1: memref<8x16xf32, #tpu.memory_space<vmem>>, %arg2: memref<8x16xf32, #tpu.memory_space<vmem>>, %arg3: memref<16x128xbf16, #tpu.memory_space<vmem>>, %arg4: memref<16x128xbf16, #tpu.memory_space<vmem>>, %arg5: memref<1x128xf32, #tpu.memory_space<vmem>>, %arg6: memref<128x128xbf16, #tpu.memory_space<vmem>>, %arg7: memref<1x128xf32, #tpu.memory_space<vmem>>, %arg8: memref<1x128xbf16, #tpu.memory_space<vmem>>, %arg9: memref<1xf32, #tpu.memory_space<smem>>, %arg10: memref<1x8xf32, #tpu.memory_space<vmem>>) attributes {dimension_semantics = [#tpu.dimension_semantics<parallel>], iteration_bounds = array<i64: 1>, scalar_prefetch = 0 : i64, scratch_operands = 0 : i64, tpu.core_type = #tpu.core_type<tc>, window_params = [{transform_indices = @transform_0, window_bounds = array<i64: 8, 16>}, {transform_indices = @transform_1, window_bounds = array<i64: 8, 16>}, {pipeline_mode = #tpu.pipeline_mode<synchronous>, transform_indices = @transform_2, window_bounds = array<i64: 16, 128>}, {pipeline_mode = #tpu.pipeline_mode<synchronous>, transform_indices = @transform_3, window_bounds = array<i64: 16, 128>}, {pipeline_mode = #tpu.pipeline_mode<synchronous>, transform_indices = @transform_4, window_bounds = array<i64: 1, 128>}, {pipeline_mode = #tpu.pipeline_mode<synchronous>, transform_indices = @transform_5, window_bounds = array<i64: 128, 128>}, {pipeline_mode = #tpu.pipeline_mode<synchronous>, transform_indices = @transform_6, window_bounds = array<i64: 1, 128>}, {pipeline_mode = #tpu.pipeline_mode<synchronous>, transform_indices = @transform_7, window_bounds = array<i64: 1, 128>}, {transform_indices = @transform_8, window_bounds = array<i64: 1>}, {transform_indices = @transform_9, window_bounds = array<i64: 1, 8>}]} {
    %c0 = arith.constant 0 : index
    %c0_0 = arith.constant 0 : index
    %0 = vector.load %arg1[%c0, %c0_0] : memref<8x16xf32, #tpu.memory_space<vmem>>, vector<8x16xf32>
    %1 = arith.truncf %0 : vector<8x16xf32> to vector<8x16xbf16>
    %c0_1 = arith.constant 0 : index
    %c0_2 = arith.constant 0 : index
    %2 = vector.load %arg2[%c0_1, %c0_2] : memref<8x16xf32, #tpu.memory_space<vmem>>, vector<8x16xf32>
    %3 = arith.truncf %2 : vector<8x16xf32> to vector<8x16xbf16>
    %c0_3 = arith.constant 0 : index
    %c0_4 = arith.constant 0 : index
    %4 = vector.load %arg3[%c0_3, %c0_4] : memref<16x128xbf16, #tpu.memory_space<vmem>>, vector<16x128xbf16>
    %cst = arith.constant dense<0.000000e+00> : vector<8x128xf32>
    %5 = tpu.matmul %1, %4, %cst {dimension_numbers = #tpu.dot_dimension_numbers<[1], [0], [0], [1], [0, 0, 1, 1], [], []>} : vector<8x16xbf16>, vector<16x128xbf16>, vector<8x128xf32> -> vector<8x128xf32>
    %c0_5 = arith.constant 0 : index
    %c0_6 = arith.constant 0 : index
    %6 = vector.load %arg4[%c0_5, %c0_6] : memref<16x128xbf16, #tpu.memory_space<vmem>>, vector<16x128xbf16>
    %cst_7 = arith.constant dense<0.000000e+00> : vector<8x128xf32>
    %7 = tpu.matmul %3, %6, %cst_7 {dimension_numbers = #tpu.dot_dimension_numbers<[1], [0], [0], [1], [0, 0, 1, 1], [], []>} : vector<8x16xbf16>, vector<16x128xbf16>, vector<8x128xf32> -> vector<8x128xf32>
    %8 = arith.addf %5, %7 : vector<8x128xf32>
    %c0_8 = arith.constant 0 : index
    %c0_9 = arith.constant 0 : index
    %9 = vector.load %arg5[%c0_8, %c0_9] : memref<1x128xf32, #tpu.memory_space<vmem>>, vector<1x128xf32>
    %10 = vector.broadcast %9 : vector<1x128xf32> to vector<8x128xf32>
    %11 = arith.addf %8, %10 : vector<8x128xf32>
    %cst_10 = arith.constant 0.000000e+00 : f32
    %12 = vector.broadcast %cst_10 : f32 to vector<8x128xf32>
    %13 = arith.maximumf %11, %12 : vector<8x128xf32>
    %14 = arith.truncf %13 : vector<8x128xf32> to vector<8x128xbf16>
    %c0_11 = arith.constant 0 : index
    %c0_12 = arith.constant 0 : index
    %15 = vector.load %arg6[%c0_11, %c0_12] : memref<128x128xbf16, #tpu.memory_space<vmem>>, vector<128x128xbf16>
    %cst_13 = arith.constant dense<0.000000e+00> : vector<8x128xf32>
    %16 = tpu.matmul %14, %15, %cst_13 {dimension_numbers = #tpu.dot_dimension_numbers<[1], [0], [0], [1], [0, 0, 1, 1], [], []>} : vector<8x128xbf16>, vector<128x128xbf16>, vector<8x128xf32> -> vector<8x128xf32>
    %c0_14 = arith.constant 0 : index
    %c0_15 = arith.constant 0 : index
    %17 = vector.load %arg7[%c0_14, %c0_15] : memref<1x128xf32, #tpu.memory_space<vmem>>, vector<1x128xf32>
    %18 = vector.broadcast %17 : vector<1x128xf32> to vector<8x128xf32>
    %19 = arith.addf %16, %18 : vector<8x128xf32>
    %cst_16 = arith.constant 0.000000e+00 : f32
    %20 = vector.broadcast %cst_16 : f32 to vector<8x128xf32>
    %21 = arith.maximumf %19, %20 : vector<8x128xf32>
    %c0_17 = arith.constant 0 : index
    %c0_18 = arith.constant 0 : index
    %22 = vector.load %arg8[%c0_17, %c0_18] : memref<1x128xbf16, #tpu.memory_space<vmem>>, vector<1x128xbf16>
    %23 = arith.truncf %21 : vector<8x128xf32> to vector<8x128xbf16>
    %cst_19 = arith.constant dense<0.000000e+00> : vector<1x8xf32>
    %24 = tpu.matmul %22, %23, %cst_19 {dimension_numbers = #tpu.dot_dimension_numbers<[1], [1], [0], [0], [0, 0, 1, 0], [], []>} : vector<1x128xbf16>, vector<8x128xbf16>, vector<1x8xf32> -> vector<1x8xf32>
    %c0_20 = arith.constant 0 : index
    %25 = memref.load %arg9[%c0_20] : memref<1xf32, #tpu.memory_space<smem>>
    %26 = vector.broadcast %25 : f32 to vector<1x8xf32>
    %27 = arith.addf %24, %26 : vector<1x8xf32>
    %c0_21 = arith.constant 0 : index
    %c0_22 = arith.constant 0 : index
    %28 = vector.load %arg10[%c0_21, %c0_22] : memref<1x8xf32, #tpu.memory_space<vmem>>, vector<1x8xf32>
    tpu.vector_store %arg10[%c0_21, %c0_22], %27 {strides = array<i32>} : memref<1x8xf32, #tpu.memory_space<vmem>>, vector<1x8xf32>,
    return
  }
  func.func @transform_0(%arg0: i32) -> (i32, i32) {
    %c0_i32 = arith.constant 0 : i32
    %c0_i32_0 = arith.constant 0 : i32
    return %arg0, %c0_i32 : i32, i32
  }
  func.func @transform_1(%arg0: i32) -> (i32, i32) {
    %c0_i32 = arith.constant 0 : i32
    %c0_i32_0 = arith.constant 0 : i32
    return %arg0, %c0_i32 : i32, i32
  }
  func.func @transform_2(%arg0: i32) -> (i32, i32) {
    %c0_i32 = arith.constant 0 : i32
    %c0_i32_0 = arith.constant 0 : i32
    %c0_i32_1 = arith.constant 0 : i32
    return %c0_i32, %c0_i32_0 : i32, i32
  }
  func.func @transform_3(%arg0: i32) -> (i32, i32) {
    %c0_i32 = arith.constant 0 : i32
    %c0_i32_0 = arith.constant 0 : i32
    %c0_i32_1 = arith.constant 0 : i32
    return %c0_i32, %c0_i32_0 : i32, i32
  }
  func.func @transform_4(%arg0: i32) -> (i32, i32) {
    %c0_i32 = arith.constant 0 : i32
    %c0_i32_0 = arith.constant 0 : i32
    %c0_i32_1 = arith.constant 0 : i32
    return %c0_i32, %c0_i32_0 : i32, i32
  }
  func.func @transform_5(%arg0: i32) -> (i32, i32) {
    %c0_i32 = arith.constant 0 : i32
    %c0_i32_0 = arith.constant 0 : i32
    %c0_i32_1 = arith.constant 0 : i32
    return %c0_i32, %c0_i32_0 : i32, i32
  }
  func.func @transform_6(%arg0: i32) -> (i32, i32) {
    %c0_i32 = arith.constant 0 : i32
    %c0_i32_0 = arith.constant 0 : i32
    %c0_i32_1 = arith.constant 0 : i32
    return %c0_i32, %c0_i32_0 : i32, i32
  }
  func.func @transform_7(%arg0: i32) -> (i32, i32) {
    %c0_i32 = arith.constant 0 : i32
    %c0_i32_0 = arith.constant 0 : i32
    %c0_i32_1 = arith.constant 0 : i32
    return %c0_i32, %c0_i32_0 : i32, i32
  }
  func.func @transform_8(%arg0: i32) -> i32 {
    %c0_i32 = arith.constant 0 : i32
    %c0_i32_0 = arith.constant 0 : i32
    return %c0_i32 : i32
  }
  func.func @transform_9(%arg0: i32) -> (i32, i32) {
    %c0_i32 = arith.constant 0 : i32
    %c0_i32_0 = arith.constant 0 : i32
    return %c0_i32, %arg0 : i32, i32
  }
}

</mosaic_0001>

<llo_original>
// kernel: tpu_custom_call.1
$region0: #{tpu_custom_call.1}
  #allocation0 [shape = 'u32[]', space=smem, size = 0x4, offset = 0x4, fixed_abs, tag = 'smem constant byte address 0x4 - core index']
  #allocation1 [shape = 'u32[144,128]{1,0:T(1,128)}', space=vmem, size = 0x12000, scoped, tag = 'internal scratch']
  #allocation2 [shape = 'f32[1]{0:T(128)S(6)}', space=smem, size = 0x200, scoped, tag = 'scoped memory for tpu_custom_call.1']
  %s0 = inlined_call_operand.hbm [shape: f32[8,16], index: 0, kind: input, shape index: {}]
  %s1 = inlined_call_operand.hbm [shape: f32[8,16], index: 1, kind: input, shape index: {}]
  %s2 = inlined_call_operand.vmem [shape: bf16[16,128], index: 2, kind: input, shape index: {}]
  %s3 = inlined_call_operand.hbm [shape: bf16[16,128], index: 3, kind: input, shape index: {}]
  %s4 = inlined_call_operand.vmem [shape: f32[1,128], index: 4, kind: input, shape index: {}]
  %s5 = inlined_call_operand.hbm [shape: bf16[128,128], index: 5, kind: input, shape index: {}]
  %s6 = inlined_call_operand.vmem [shape: f32[1,128], index: 6, kind: input, shape index: {}]
  %s7 = inlined_call_operand.vmem [shape: bf16[1,128], index: 7, kind: input, shape index: {}]
  %s8 = inlined_call_operand.<no memory space> [shape: f32[1], index: 8, kind: input, shape index: {}]
  %s9 = inlined_call_operand.hbm [shape: f32[1,8], index: 9, kind: output, shape index: {}]
  %s10 = sld [smem:[#allocation0]]
  $region62: #{tpu_custom_call.1} parent=0
    _
  %s12 = ssub.s32 1, %s10
  %s13 = scalar_select 0, %s12, %s10
  %14 = sst [smem:[#allocation2]] %s8
  $region1: #{tpu_custom_call.1} parent=0
    #allocation3 [shape = 'u8[4096]{0}', space=vmem, size = 0x1000, scoped, tag = 'input window, operand 0, single buffered']
    #allocation4 [shape = 's32[1]{0}', space=sflag, size = 0x4, scoped, tag = 'scoped memory for tpu_custom_call.1']
    #allocation5 [shape = 's32[1]{0}', space=sflag, size = 0x4, scoped, tag = 'scoped memory for tpu_custom_call.1']
    #allocation6 [shape = 'u8[4096]{0}', space=vmem, size = 0x1000, scoped, tag = 'input window, operand 1, single buffered']
    #allocation7 [shape = 's32[1]{0}', space=sflag, size = 0x4, scoped, tag = 'scoped memory for tpu_custom_call.1']
    #allocation8 [shape = 'u8[4096]{0}', space=vmem, size = 0x1000, scoped, tag = 'input window, operand 3, single buffered']
    #allocation9 [shape = 'u8[32768]{0}', space=vmem, size = 0x8000, scoped, tag = 'input window, operand 5, single buffered']
    #allocation10 [shape = 's32[1]{0}', space=sflag, size = 0x4, scoped, tag = 'scoped memory for tpu_custom_call.1']
    #allocation11 [shape = 'u8[512]{0}', space=vmem, size = 0x400, scoped, tag = 'output window, operand 0, single buffered']
    %15 = vsyncpa [#allocation4], 0
    %16 = vsyncpa [#allocation7], 0
    %17 = vsyncpa [#allocation10], 0
    %18 = vsyncpa [#allocation5], 0
    // Predicated region
    $region2: #{tpu_custom_call.1} parent=1 // pred_check
      _
    $region3: #{tpu_custom_call.1} parent=1 // pred_check_branch
      %20 = sbr.rel (0) target = $region5
    $region4: #{tpu_custom_call.1} parent=1 // pred_region
      %s22 = ssub.s32 128, 128
      %23 = vsyncadd [#allocation4], %s22
      %s25 = sshll.u32 [#allocation3], 4
      %s26 = int_to_ptr.vmem [resolvable:$true] %s25
      %28 = dma.hbm_to_vmem [thread:$0]  %s0, 128, %s26, [#allocation4]
    $region5: #{tpu_custom_call.1} parent=1 // pred_fallthru
      _
    // Predicated region
    $region6: #{tpu_custom_call.1} parent=1 // pred_check
      _
    $region7: #{tpu_custom_call.1} parent=1 // pred_check_branch
      %30 = sbr.rel (0) target = $region9
    $region8: #{tpu_custom_call.1} parent=1 // pred_region
      %s32 = ssub.s32 128, 128
      %33 = vsyncadd [#allocation7], %s32
      %s35 = sshll.u32 [#allocation6], 4
      %s36 = int_to_ptr.vmem [resolvable:$true] %s35
      %38 = dma.hbm_to_vmem [thread:$0]  %s1, 128, %s36, [#allocation7]
    $region9: #{tpu_custom_call.1} parent=1 // pred_fallthru
      _
    // Predicated region
    $region10: #{tpu_custom_call.1} parent=1 // pred_check
      _
    $region11: #{tpu_custom_call.1} parent=1 // pred_check_branch
      %40 = sbr.rel (0) target = $region13
    $region12: #{tpu_custom_call.1} parent=1 // pred_region
      _
    $region13: #{tpu_custom_call.1} parent=1 // pred_fallthru
      _
    // Predicated region
    $region14: #{tpu_custom_call.1} parent=1 // pred_check
      _
    $region15: #{tpu_custom_call.1} parent=1 // pred_check_branch
      %42 = sbr.rel (0) target = $region17
    $region16: #{tpu_custom_call.1} parent=1 // pred_region
      %s44 = ssub.s32 128, 128
      %45 = vsyncadd [#allocation7], %s44
      %s46 = sshll.u32 [#allocation8], 4
      %s47 = int_to_ptr.vmem [resolvable:$true] %s46
      %52 = dma.hbm_to_vmem [thread:$0]  %s3, 128, %s47, [#allocation7], 64, 64, 4
    $region17: #{tpu_custom_call.1} parent=1 // pred_fallthru
      _
    // Predicated region
    $region18: #{tpu_custom_call.1} parent=1 // pred_check
      _
    $region19: #{tpu_custom_call.1} parent=1 // pred_check_branch
      %54 = sbr.rel (0) target = $region21
    $region20: #{tpu_custom_call.1} parent=1 // pred_region
      _
    $region21: #{tpu_custom_call.1} parent=1 // pred_fallthru
      _
    // Predicated region
    $region22: #{tpu_custom_call.1} parent=1 // pred_check
      _
    $region23: #{tpu_custom_call.1} parent=1 // pred_check_branch
      %56 = sbr.rel (0) target = $region25
    $region24: #{tpu_custom_call.1} parent=1 // pred_region
      %s58 = ssub.s32 1024, 1024
      %59 = vsyncadd [#allocation10], %s58
      %s60 = sshll.u32 [#allocation9], 4
      %s61 = int_to_ptr.vmem [resolvable:$true] %s60
      %66 = dma.hbm_to_vmem [thread:$0]  %s5, 1024, %s61, [#allocation10], 64, 64, 4
    $region25: #{tpu_custom_call.1} parent=1 // pred_fallthru
      _
    // Predicated region
    $region26: #{tpu_custom_call.1} parent=1 // pred_check
      _
    $region27: #{tpu_custom_call.1} parent=1 // pred_check_branch
      %68 = sbr.rel (0) target = $region29
    $region28: #{tpu_custom_call.1} parent=1 // pred_region
      _
    $region29: #{tpu_custom_call.1} parent=1 // pred_fallthru
      _
    // Predicated region
    $region30: #{tpu_custom_call.1} parent=1 // pred_check
      _
    $region31: #{tpu_custom_call.1} parent=1 // pred_check_branch
      %70 = sbr.rel (0) target = $region33
    $region32: #{tpu_custom_call.1} parent=1 // pred_region
      _
    $region33: #{tpu_custom_call.1} parent=1 // pred_fallthru
      _
    // Predicated region
    $region34: #{tpu_custom_call.1} parent=1 // pred_check
      _
    $region35: #{tpu_custom_call.1} parent=1 // pred_check_branch
      %72 = sbr.rel (0) target = $region37
    $region36: #{tpu_custom_call.1} parent=1 // pred_region
      _
    $region37: #{tpu_custom_call.1} parent=1 // pred_fallthru
      _
    // Predicated region
    $region38: #{tpu_custom_call.1} parent=1 // pred_check
      _
    $region39: #{tpu_custom_call.1} parent=1 // pred_check_branch
      %74 = sbr.rel (0) target = $region41
    $region40: #{tpu_custom_call.1} parent=1 // pred_region
      %75 = dma.done [#allocation4], 128
    $region41: #{tpu_custom_call.1} parent=1 // pred_fallthru
      _
    // Predicated region
    $region42: #{tpu_custom_call.1} parent=1 // pred_check
      _
    $region43: #{tpu_custom_call.1} parent=1 // pred_check_branch
      %77 = sbr.rel (0) target = $region45
    $region44: #{tpu_custom_call.1} parent=1 // pred_region
      %78 = dma.done [#allocation7], 128
    $region45: #{tpu_custom_call.1} parent=1 // pred_fallthru
      _
    // Predicated region
    $region46: #{tpu_custom_call.1} parent=1 // pred_check
      _
    $region47: #{tpu_custom_call.1} parent=1 // pred_check_branch
      %80 = sbr.rel (0) target = $region49
    $region48: #{tpu_custom_call.1} parent=1 // pred_region
      %81 = dma.done [#allocation7], 128
    $region49: #{tpu_custom_call.1} parent=1 // pred_fallthru
      _
    // Predicated region
    $region50: #{tpu_custom_call.1} parent=1 // pred_check
      _
    $region51: #{tpu_custom_call.1} parent=1 // pred_check_branch
      %83 = sbr.rel (0) target = $region53
    $region52: #{tpu_custom_call.1} parent=1 // pred_region
      %84 = dma.done [#allocation10], 1024
    $region53: #{tpu_custom_call.1} parent=1 // pred_fallthru
      _
    %v86 = vld [vmem:[#allocation3] sm:$0xff]
    %v87 = vpack.c.bf16 %v86, %v86
    %v88 = vld [vmem:[#allocation6] sm:$0xff]
    %v89 = vpack.c.bf16 %v88, %v88
    %v90 = vld [vmem:[%s2] sm:$0xf]
    %v91 = vld [vmem:[%s2 + $0x4] sm:$0xf]
    %v92 = vld [vmem:[#allocation8] sm:$0xf]
    %v93 = vld [vmem:[#allocation8 + $0x4] sm:$0xf]
    %v96 = vunpack.c.l.b16 %v92
    %v97 = vunpack.c.l.b16 %v93
    %v98 = vpack.c.b16 %v97, %v96
    %vm100 = vcmask 130048
    %v102 = vsel %vm100, %v89, 0
    %104 = vmatprep.subr.bf16.mxu0 0
    %105 = vmatpush1.bf16.msra.mxu0 %v98
    %106 = vmatprep.subr.bf16.mxu0 0
    %107 = vmatpush1.bf16.msra.mxu0 0
    %108 = vmatprep.subr.bf16.mxu0 0
    %109 = vmatpush1.bf16.msra.mxu0 0
    %110 = vmatprep.subr.bf16.mxu0 0
    %111 = vmatpush1.bf16.msra.mxu0 0
    %112 = vmatprep.subr.bf16.mxu0 0
    %113 = vmatpush1.bf16.msra.mxu0 0
    %114 = vmatprep.subr.bf16.mxu0 0
    %115 = vmatpush1.bf16.msra.mxu0 0
    %116 = vmatprep.subr.bf16.mxu0 0
    %117 = vmatpush1.bf16.msra.mxu0 0
    %118 = vmatprep.subr.bf16.mxu0 0
    %119 = vmatpush1.bf16.msra.mxu0 0
    %120 = vmatprep.subr.bf16.mxu0 0
    %121 = vmatpush1.bf16.msra.mxu0 0
    %122 = vmatprep.subr.bf16.mxu0 0
    %123 = vmatpush1.bf16.msra.mxu0 0
    %124 = vmatprep.subr.bf16.mxu0 0
    %125 = vmatpush1.bf16.msra.mxu0 0
    %126 = vmatprep.subr.bf16.mxu0 0
    %127 = vmatpush1.bf16.msra.mxu0 0
    %128 = vmatprep.subr.bf16.mxu0 0
    %129 = vmatpush1.bf16.msra.mxu0 0
    %130 = vmatprep.subr.bf16.mxu0 0
    %131 = vmatpush1.bf16.msra.mxu0 0
    %132 = vmatprep.subr.bf16.mxu0 0
    %133 = vmatpush1.bf16.msra.mxu0 0
    %134 = vmatprep.subr.bf16.mxu0 0
    %135 = vmatpush1.bf16.msra.mxu0 0
    %136 = vmatprep.mubr.bf16.mxu0 0
    %137 = vmatmul.mubr.bf16.gmra.mrb[0].mxu0 %v102
    %v138 = vpop.f32.mrb[0].mxu0
    %v139 = vadd.f32 0.0, %v138
    %v140 = vpop.f32.mrb[0].mxu0
    %v141 = vpop.f32.mrb[0].mxu0
    %v142 = vpop.f32.mrb[0].mxu0
    %143 = vdwg.mxu0
    %v146 = vunpack.c.l.b16 %v90
    %v147 = vunpack.c.l.b16 %v91
    %v148 = vpack.c.b16 %v147, %v146
    %v151 = vsel %vm100, %v87, 0
    %153 = vmatprep.subr.bf16.mxu0 0
    %154 = vmatpush1.bf16.msra.mxu0 %v148
    %155 = vmatprep.subr.bf16.mxu0 0
    %156 = vmatpush1.bf16.msra.mxu0 0
    %157 = vmatprep.subr.bf16.mxu0 0
    %158 = vmatpush1.bf16.msra.mxu0 0
    %159 = vmatprep.subr.bf16.mxu0 0
    %160 = vmatpush1.bf16.msra.mxu0 0
    %161 = vmatprep.subr.bf16.mxu0 0
    %162 = vmatpush1.bf16.msra.mxu0 0
    %163 = vmatprep.subr.bf16.mxu0 0
    %164 = vmatpush1.bf16.msra.mxu0 0
    %165 = vmatprep.subr.bf16.mxu0 0
    %166 = vmatpush1.bf16.msra.mxu0 0
    %167 = vmatprep.subr.bf16.mxu0 0
    %168 = vmatpush1.bf16.msra.mxu0 0
    %169 = vmatprep.subr.bf16.mxu0 0
    %170 = vmatpush1.bf16.msra.mxu0 0
    %171 = vmatprep.subr.bf16.mxu0 0
    %172 = vmatpush1.bf16.msra.mxu0 0
    %173 = vmatprep.subr.bf16.mxu0 0
    %174 = vmatpush1.bf16.msra.mxu0 0
    %175 = vmatprep.subr.bf16.mxu0 0
    %176 = vmatpush1.bf16.msra.mxu0 0
    %177 = vmatprep.subr.bf16.mxu0 0
    %178 = vmatpush1.bf16.msra.mxu0 0
    %179 = vmatprep.subr.bf16.mxu0 0
    %180 = vmatpush1.bf16.msra.mxu0 0
    %181 = vmatprep.subr.bf16.mxu0 0
    %182 = vmatpush1.bf16.msra.mxu0 0
    %183 = vmatprep.subr.bf16.mxu0 0
    %184 = vmatpush1.bf16.msra.mxu0 0
    %185 = vmatprep.mubr.bf16.mxu0 0
    %186 = vmatmul.mubr.bf16.gmra.mrb[0].mxu0 %v151
    %v187 = vpop.f32.mrb[0].mxu0
    %v188 = vadd.f32 %v139, %v187
    %v189 = vpop.f32.mrb[0].mxu0
    %v190 = vpop.f32.mrb[0].mxu0
    %v191 = vpop.f32.mrb[0].mxu0
    %192 = vdwg.mxu0
    %v193 = vld [vmem:[%s4] sm:$0x1]
    %v195 = vlaneseq
    %v196 = vshrl.u32 %v195, 7
    %v197 = vsub.s32 0, %v196
    %v198 = vrot.slane %v193, %v197
    %v200 = vadd.f32 %v188, %v198
    %v201 = vmax.f32 %v200, 0.0
    %v202 = vpack.c.bf16 %v201, %v201
    %v203 = vld [vmem:[#allocation9] sm:$0xf]
    %v204 = vld [vmem:[#allocation9 + $0x4] sm:$0xf]
    %v205 = vld [vmem:[#allocation9 + $0x8] sm:$0xf]
    %v206 = vld [vmem:[#allocation9 + $0xc] sm:$0xf]
    %v207 = vld [vmem:[#allocation9 + $0x10] sm:$0xf]
    %v208 = vld [vmem:[#allocation9 + $0x14] sm:$0xf]
    %v209 = vld [vmem:[#allocation9 + $0x18] sm:$0xf]
    %v210 = vld [vmem:[#allocation9 + $0x1c] sm:$0xf]
    %v211 = vld [vmem:[#allocation9 + $0x20] sm:$0xf]
    %v212 = vld [vmem:[#allocation9 + $0x24] sm:$0xf]
    %v213 = vld [vmem:[#allocation9 + $0x28] sm:$0xf]
    %v214 = vld [vmem:[#allocation9 + $0x2c] sm:$0xf]
    %v215 = vld [vmem:[#allocation9 + $0x30] sm:$0xf]
    %v216 = vld [vmem:[#allocation9 + $0x34] sm:$0xf]
    %v217 = vld [vmem:[#allocation9 + $0x38] sm:$0xf]
    %v218 = vld [vmem:[#allocation9 + $0x3c] sm:$0xf]
    %v219 = vld [vmem:[%s6] sm:$0x1]
    %v221 = vlaneseq
    %v222 = vshrl.u32 %v221, 7
    %v223 = vsub.s32 0, %v222
    %v224 = vrot.slane %v219, %v223
    %v242 = vunpack.c.l.b16 %v203
    %v243 = vunpack.c.l.b16 %v204
    %v244 = vunpack.c.l.b16 %v205
    %v245 = vunpack.c.l.b16 %v206
    %v246 = vunpack.c.l.b16 %v207
    %v247 = vunpack.c.l.b16 %v208
    %v248 = vunpack.c.l.b16 %v209
    %v249 = vunpack.c.l.b16 %v210
    %v250 = vunpack.c.l.b16 %v211
    %v251 = vunpack.c.l.b16 %v212
    %v252 = vunpack.c.l.b16 %v213
    %v253 = vunpack.c.l.b16 %v214
    %v254 = vunpack.c.l.b16 %v215
    %v255 = vunpack.c.l.b16 %v216
    %v256 = vunpack.c.l.b16 %v217
    %v257 = vunpack.c.l.b16 %v218
    %v258 = vpack.c.b16 %v243, %v242
    %v259 = vpack.c.b16 %v245, %v244
    %v260 = vpack.c.b16 %v247, %v246
    %v261 = vpack.c.b16 %v249, %v248
    %v262 = vpack.c.b16 %v251, %v250
    %v263 = vpack.c.b16 %v253, %v252
    %v264 = vpack.c.b16 %v255, %v254
    %v265 = vpack.c.b16 %v257, %v256
    %274 = vmatprep.subr.bf16.mxu0 0
    %275 = vmatpush1.bf16.msra.mxu0 %v258
    %276 = vmatprep.subr.bf16.mxu0 0
    %277 = vmatpush1.bf16.msra.mxu0 %v259
    %278 = vmatprep.subr.bf16.mxu0 0
    %279 = vmatpush1.bf16.msra.mxu0 %v260
    %280 = vmatprep.subr.bf16.mxu0 0
    %281 = vmatpush1.bf16.msra.mxu0 %v261
    %282 = vmatprep.subr.bf16.mxu0 0
    %283 = vmatpush1.bf16.msra.mxu0 %v262
    %284 = vmatprep.subr.bf16.mxu0 0
    %285 = vmatpush1.bf16.msra.mxu0 %v263
    %286 = vmatprep.subr.bf16.mxu0 0
    %287 = vmatpush1.bf16.msra.mxu0 %v264
    %288 = vmatprep.subr.bf16.mxu0 0
    %289 = vmatpush1.bf16.msra.mxu0 %v265
    %290 = vmatprep.subr.bf16.mxu0 0
    %291 = vmatpush1.bf16.msra.mxu0 0
    %292 = vmatprep.subr.bf16.mxu0 0
    %293 = vmatpush1.bf16.msra.mxu0 0
    %294 = vmatprep.subr.bf16.mxu0 0
    %295 = vmatpush1.bf16.msra.mxu0 0
    %296 = vmatprep.subr.bf16.mxu0 0
    %297 = vmatpush1.bf16.msra.mxu0 0
    %298 = vmatprep.subr.bf16.mxu0 0
    %299 = vmatpush1.bf16.msra.mxu0 0
    %300 = vmatprep.subr.bf16.mxu0 0
    %301 = vmatpush1.bf16.msra.mxu0 0
    %302 = vmatprep.subr.bf16.mxu0 0
    %303 = vmatpush1.bf16.msra.mxu0 0
    %304 = vmatprep.subr.bf16.mxu0 0
    %305 = vmatpush1.bf16.msra.mxu0 0
    %306 = vmatprep.mubr.bf16.mxu0 0
    %307 = vmatmul.mubr.bf16.gmra.mrb[0].mxu0 %v202
    %v308 = vpop.f32.mrb[0].mxu0
    %v309 = vadd.f32 %v224, %v308
    %v310 = vpop.f32.mrb[0].mxu0
    %v311 = vpop.f32.mrb[0].mxu0
    %v312 = vpop.f32.mrb[0].mxu0
    %313 = vdwg.mxu0
    %v314 = vmax.f32 %v309, 0.0
    %v315 = vld [vmem:[%s7] sm:$0x1]
    %v316 = vpack.c.bf16 %v314, %v314
    %s317 = sld [smem:[#allocation2]]
    %v318 = vstv %s317
    %319 = vmatprep.subr.bf16.mxu0 0
    %320 = vmatpush1.bf16.xpose.msra.mxu0 %v316
    %321 = vmatprep.subr.bf16.mxu0 0
    %322 = vmatpush1.bf16.xpose.msra.mxu0 0
    %323 = vmatprep.subr.bf16.mxu0 0
    %324 = vmatpush1.bf16.xpose.msra.mxu0 0
    %325 = vmatprep.subr.bf16.mxu0 0
    %326 = vmatpush1.bf16.xpose.msra.mxu0 0
    %327 = vmatprep.subr.bf16.mxu0 0
    %328 = vmatpush1.bf16.xpose.msra.mxu0 0
    %329 = vmatprep.subr.bf16.mxu0 0
    %330 = vmatpush1.bf16.xpose.msra.mxu0 0
    %331 = vmatprep.subr.bf16.mxu0 0
    %332 = vmatpush1.bf16.xpose.msra.mxu0 0
    %333 = vmatprep.subr.bf16.mxu0 0
    %334 = vmatpush1.bf16.xpose.msra.mxu0 0
    %335 = vmatprep.subr.bf16.mxu0 0
    %336 = vmatpush1.bf16.xpose.msra.mxu0 0
    %337 = vmatprep.subr.bf16.mxu0 0
    %338 = vmatpush1.bf16.xpose.msra.mxu0 0
    %339 = vmatprep.subr.bf16.mxu0 0
    %340 = vmatpush1.bf16.xpose.msra.mxu0 0
    %341 = vmatprep.subr.bf16.mxu0 0
    %342 = vmatpush1.bf16.xpose.msra.mxu0 0
    %343 = vmatprep.subr.bf16.mxu0 0
    %344 = vmatpush1.bf16.xpose.msra.mxu0 0
    %345 = vmatprep.subr.bf16.mxu0 0
    %346 = vmatpush1.bf16.xpose.msra.mxu0 0
    %347 = vmatprep.subr.bf16.mxu0 0
    %348 = vmatpush1.bf16.xpose.msra.mxu0 0
    %349 = vmatprep.subr.bf16.mxu0 0
    %350 = vmatpush1.bf16.xpose.msra.mxu0 0
    %351 = vmatprep.mubr.bf16.mxu0 0
    %352 = vmatmul.mubr.bf16.gmra.mrb[0].mxu0 %v315
    %v353 = vpop.f32.mrb[0].mxu0
    %v354 = vadd.f32 %v318, %v353
    %v355 = vpop.f32.mrb[0].mxu0
    %v356 = vpop.f32.mrb[0].mxu0
    %v357 = vpop.f32.mrb[0].mxu0
    %358 = vdwg.mxu0
    %vm359 = vcmask 57344
    %360 = vst.msk [vmem:[#allocation11] sm:$0x1] %vm359, %v354
    // Predicated region
    $region54: #{tpu_custom_call.1} parent=1 // pred_check
      _
    $region55: #{tpu_custom_call.1} parent=1 // pred_check_branch
      %362 = sbr.rel (0) target = $region57
    $region56: #{tpu_custom_call.1} parent=1 // pred_region
      %s364 = ssub.s32 16, 16
      %365 = vsyncadd [#allocation5], %s364
      %s367 = sshll.u32 [#allocation11], 4
      %s368 = int_to_ptr.vmem [resolvable:$true] %s367
      %370 = dma.vmem_to_hbm [thread:$0]  %s368, 16, %s9, [#allocation5]
    $region57: #{tpu_custom_call.1} parent=1 // pred_fallthru
      _
    // Predicated region
    $region58: #{tpu_custom_call.1} parent=1 // pred_check
      _
    $region59: #{tpu_custom_call.1} parent=1 // pred_check_branch
      %372 = sbr.rel (0) target = $region61
    $region60: #{tpu_custom_call.1} parent=1 // pred_region
      %373 = dma.done [#allocation5], 16
    $region61: #{tpu_custom_call.1} parent=1 // pred_fallthru
      _
    %374 = vsyncpa [#allocation4], 1
    %375 = vsyncpa [#allocation7], 1
    %376 = vsyncpa [#allocation10], 1
    %377 = vsyncpa [#allocation5], 1

</llo_original>
